<compile_context>
chip_gen: v6e
topology: v6e:2x2x1
jax: 0.10.0
libtpu: 0.0.40
codegen_flags: <defaults>
</compile_context>

<pallas_src>
import functools

import jax
import jax.numpy as jnp
from jax.experimental import pallas as pl
from jax.experimental.pallas import tpu as pltpu

NEG_SLOPE = 0.01   # PyTorch LeakyReLU default
IN_DIM = 6
OUT_DIM = 6
LANE = 128


def _round_up(n, m):
    return ((n + m - 1) // m) * m


def _leaky_relu(h):
    return jnp.where(h > 0, h, NEG_SLOPE * h)


def _actor_kernel(x_ref, w1_ref, w2_ref, w3_ref, c_ref, o_ref):
    """One (TB, 6) batch tile through the whole MLP.

    x_ref : (TB, 6)   f32   streamed per grid step
    w1_ref: (6, Hp)   bf16  resident
    w2_ref: (Hp, Hp)  bf16  resident
    w3_ref: (Hp, 6)   bf16  resident
    c_ref : (4, Hp)   f32   resident; rows = b1, b2, b3 (padded), scale (padded)
    o_ref : (TB, 6)   f32
    """
    c = c_ref[...]
    b1 = c[0:1, :]                     # (1, Hp)
    b2 = c[1:2, :]                     # (1, Hp)
    b3 = c[2:3, :OUT_DIM]              # (1, 6)
    scale = c[3:4, :OUT_DIM]           # (1, 6)

    x = x_ref[...]                     # (TB, 6) f32

    # Layer 1: Linear(6 -> Hp) + LeakyReLU (bf16 MXU, f32 accumulate/VPU).
    h = jnp.dot(x.astype(jnp.bfloat16), w1_ref[...],
                preferred_element_type=jnp.float32) + b1
    h = _leaky_relu(h)

    # Layer 2: Linear(Hp -> Hp) + LeakyReLU.
    h = jnp.dot(h.astype(jnp.bfloat16), w2_ref[...],
                preferred_element_type=jnp.float32) + b2
    h = _leaky_relu(h)

    # Layer 3: Linear(Hp -> 6).
    y = jnp.dot(h.astype(jnp.bfloat16), w3_ref[...],
                preferred_element_type=jnp.float32) + b3

    # Scale: bound and apply per-component constraints.
    o_ref[...] = (jnp.tanh(y) * scale).astype(o_ref.dtype)


@functools.partial(jax.jit, static_argnames=("block_batch",))
def actor_forward(x, w1, w2, w3, consts, *, block_batch=4096):
    """Fused actor MLP. x: (B, 6) f32 -> (B, 6) f32."""
    batch = x.shape[0]
    hp = w1.shape[1]

    # Batch tile: multiple of 8 sublanes, capped so double-buffered x/out plus
    # the two live (TB, Hp) activations stay a few MiB (fits every chip gen).
    tb = min(block_batch, _round_up(batch, 8))
    num_tiles = pl.cdiv(batch, tb)
    padded_b = num_tiles * tb
    if padded_b != batch:
        x = jnp.pad(x, ((0, padded_b - batch), (0, 0)))

    out = pl.pallas_call(
        _actor_kernel,
        out_shape=jax.ShapeDtypeStruct((padded_b, OUT_DIM), jnp.float32),
        grid=(num_tiles,),
        in_specs=[
            pl.BlockSpec((tb, IN_DIM), lambda i: (i, 0)),    # x: streamed
            pl.BlockSpec((IN_DIM, hp), lambda i: (0, 0)),    # w1: resident
            pl.BlockSpec((hp, hp), lambda i: (0, 0)),        # w2: resident
            pl.BlockSpec((hp, OUT_DIM), lambda i: (0, 0)),   # w3: resident
            pl.BlockSpec((4, hp), lambda i: (0, 0)),         # consts: resident
        ],
        out_specs=pl.BlockSpec((tb, OUT_DIM), lambda i: (i, 0)),
        compiler_params=pltpu.CompilerParams(
            dimension_semantics=("parallel",)),              # 2x on v7x dual-TC
    )(x, w1, w2, w3, consts)
    return out[:batch]


def init_params(key, actor_layer_size=100,
                constraints_linear=1.0, constraints_angle=0.5):
    """PyTorch-style Linear init; weights stored as (in, out) = W^T."""
    def linear_init(k, fan_in, fan_out):
        kw, kb = jax.random.split(k)
        bound = 1.0 / jnp.sqrt(fan_in)
        w = jax.random.uniform(kw, (fan_in, fan_out), jnp.float32, -bound, bound)
        b = jax.random.uniform(kb, (fan_out,), jnp.float32, -bound, bound)
        return w, b

    k1, k2, k3 = jax.random.split(key, 3)
    w1, b1 = linear_init(k1, IN_DIM, actor_layer_size)
    w2, b2 = linear_init(k2, actor_layer_size, actor_layer_size)
    w3, b3 = linear_init(k3, actor_layer_size, OUT_DIM)
    scale = jnp.array([constraints_linear] * 3 + [constraints_angle] * 3,
                      dtype=jnp.float32)
    return w1, b1, w2, b2, w3, b3, scale


def prepare_params(w1, b1, w2, b2, w3, b3, scale):
    """Zero-pad hidden dim to a lane multiple (128), cast weights to bf16 and
    fuse the small per-layer constants into one (4, Hp) f32 array."""
    h = w1.shape[1]
    hp = _round_up(h, LANE)

    w1p = jnp.zeros((IN_DIM, hp), jnp.bfloat16).at[:, :h].set(
        w1.astype(jnp.bfloat16))
    w2p = jnp.zeros((hp, hp), jnp.bfloat16).at[:h, :h].set(
        w2.astype(jnp.bfloat16))
    w3p = jnp.zeros((hp, OUT_DIM), jnp.bfloat16).at[:h, :].set(
        w3.astype(jnp.bfloat16))

    consts = jnp.zeros((4, hp), jnp.float32)
    consts = consts.at[0, :h].set(b1)
    consts = consts.at[1, :h].set(b2)
    consts = consts.at[2, :OUT_DIM].set(b3)
    consts = consts.at[3, :OUT_DIM].set(scale)
    return w1p, w2p, w3p, consts


if __name__ == "__main__":
    key = jax.random.PRNGKey(0)
    k_params, k_x1, k_x2 = jax.random.split(key, 3)

    raw = init_params(k_params, actor_layer_size=100,
                      constraints_linear=1.0, constraints_angle=0.5)
    w1, b1, w2, b2, w3, b3, scale = raw
    params = prepare_params(*raw)
    w1p, w2p, w3p, consts = params

    def module_ref_f32(x):
        """Original module math in pure f32 JAX."""
        h = _leaky_relu(x @ w1 + b1)
        h = _leaky_relu(h @ w2 + b2)
        return jnp.tanh(h @ w3 + b3) * scale

    def kernel_math_ref(x):
        """Exact same (bf16-weight, f32-accumulate) math as the kernel."""
        h = jnp.dot(x.astype(jnp.bfloat16), w1p,
                    preferred_element_type=jnp.float32) + consts[0:1, :]
        h = _leaky_relu(h)
        h = jnp.dot(h.astype(jnp.bfloat16), w2p,
                    preferred_element_type=jnp.float32) + consts[1:2, :]
        h = _leaky_relu(h)
        y = jnp.dot(h.astype(jnp.bfloat16), w3p,
                    preferred_element_type=jnp.float32) + consts[2:3, :OUT_DIM]
        return jnp.tanh(y) * consts[3:4, :OUT_DIM]

    # 1) Small batch (single grid tile).
    x_small = jax.random.normal(k_x1, (8, IN_DIM), dtype=jnp.float32)
    out_small = actor_forward(x_small, *params)
    jax.block_until_ready(out_small)
    assert out_small.shape == (8, OUT_DIM)
    assert jnp.allclose(out_small, kernel_math_ref(x_small), atol=1e-4, rtol=1e-4)
    assert jnp.allclose(out_small, module_ref_f32(x_small), atol=5e-2, rtol=5e-2)

    # 2) Larger ragged batch: exercises the multi-tile grid + batch padding.
    x_big = jax.random.normal(k_x2, (2050, IN_DIM), dtype=jnp.float32)
    out_big = actor_forward(x_big, *params, block_batch=512)
    jax.block_until_ready(out_big)
    assert out_big.shape == (2050, OUT_DIM)
    assert jnp.allclose(out_big, kernel_math_ref(x_big), atol=1e-4, rtol=1e-4)
    assert jnp.allclose(out_big, module_ref_f32(x_big), atol=5e-2, rtol=5e-2)

    print("KERNEL_OK")
</pallas_src>

<mosaic_0001>
module attributes {stable_mosaic.version = 11 : i64} {
  func.func @_actor_kernel(%arg0: i32, %arg1: memref<8x6xf32, #tpu.memory_space<vmem>>, %arg2: memref<6x128xbf16, #tpu.memory_space<vmem>>, %arg3: memref<128x128xbf16, #tpu.memory_space<vmem>>, %arg4: memref<128x6xbf16, #tpu.memory_space<vmem>>, %arg5: memref<4x128xf32, #tpu.memory_space<vmem>>, %arg6: memref<8x6xf32, #tpu.memory_space<vmem>>) attributes {dimension_semantics = [#tpu.dimension_semantics<parallel>], iteration_bounds = array<i64: 1>, scalar_prefetch = 0 : i64, scratch_operands = 0 : i64, tpu.core_type = #tpu.core_type<tc>, window_params = [{transform_indices = @transform_0, window_bounds = array<i64: 8, 6>}, {pipeline_mode = #tpu.pipeline_mode<synchronous>, transform_indices = @transform_1, window_bounds = array<i64: 6, 128>}, {pipeline_mode = #tpu.pipeline_mode<synchronous>, transform_indices = @transform_2, window_bounds = array<i64: 128, 128>}, {pipeline_mode = #tpu.pipeline_mode<synchronous>, transform_indices = @transform_3, window_bounds = array<i64: 128, 6>}, {pipeline_mode = #tpu.pipeline_mode<synchronous>, transform_indices = @transform_4, window_bounds = array<i64: 4, 128>}, {transform_indices = @transform_5, window_bounds = array<i64: 8, 6>}]} {
    %c0 = arith.constant 0 : index
    %c0_0 = arith.constant 0 : index
    %0 = vector.load %arg5[%c0, %c0_0] : memref<4x128xf32, #tpu.memory_space<vmem>>, vector<4x128xf32>
    %1 = vector.extract_strided_slice %0 {offsets = [0, 0], sizes = [1, 128], strides = [1, 1]} : vector<4x128xf32> to vector<1x128xf32>
    %2 = vector.extract_strided_slice %0 {offsets = [1, 0], sizes = [1, 128], strides = [1, 1]} : vector<4x128xf32> to vector<1x128xf32>
    %3 = vector.extract_strided_slice %0 {offsets = [2, 0], sizes = [1, 6], strides = [1, 1]} : vector<4x128xf32> to vector<1x6xf32>
    %4 = vector.extract_strided_slice %0 {offsets = [3, 0], sizes = [1, 6], strides = [1, 1]} : vector<4x128xf32> to vector<1x6xf32>
    %c0_1 = arith.constant 0 : index
    %c0_2 = arith.constant 0 : index
    %5 = vector.load %arg1[%c0_1, %c0_2] : memref<8x6xf32, #tpu.memory_space<vmem>>, vector<8x6xf32>
    %6 = arith.truncf %5 : vector<8x6xf32> to vector<8x6xbf16>
    %c0_3 = arith.constant 0 : index
    %c0_4 = arith.constant 0 : index
    %7 = vector.load %arg2[%c0_3, %c0_4] : memref<6x128xbf16, #tpu.memory_space<vmem>>, vector<6x128xbf16>
    %cst = arith.constant dense<0.000000e+00> : vector<8x128xf32>
    %8 = tpu.matmul %6, %7, %cst {dimension_numbers = #tpu.dot_dimension_numbers<[1], [0], [0], [1], [0, 0, 1, 1], [], []>} : vector<8x6xbf16>, vector<6x128xbf16>, vector<8x128xf32> -> vector<8x128xf32>
    %9 = vector.broadcast %1 : vector<1x128xf32> to vector<8x128xf32>
    %10 = arith.addf %8, %9 : vector<8x128xf32>
    %cst_5 = arith.constant 0.000000e+00 : f32
    %11 = vector.broadcast %cst_5 : f32 to vector<8x128xf32>
    %12 = arith.cmpf ogt, %10, %11 : vector<8x128xf32>
    %cst_6 = arith.constant 0.00999999977 : f32
    %13 = vector.broadcast %cst_6 : f32 to vector<8x128xf32>
    %14 = arith.mulf %13, %10 : vector<8x128xf32>
    %15 = arith.select %12, %10, %14 : vector<8x128xi1>, vector<8x128xf32>
    %16 = arith.truncf %15 : vector<8x128xf32> to vector<8x128xbf16>
    %c0_7 = arith.constant 0 : index
    %c0_8 = arith.constant 0 : index
    %17 = vector.load %arg3[%c0_7, %c0_8] : memref<128x128xbf16, #tpu.memory_space<vmem>>, vector<128x128xbf16>
    %cst_9 = arith.constant dense<0.000000e+00> : vector<8x128xf32>
    %18 = tpu.matmul %16, %17, %cst_9 {dimension_numbers = #tpu.dot_dimension_numbers<[1], [0], [0], [1], [0, 0, 1, 1], [], []>} : vector<8x128xbf16>, vector<128x128xbf16>, vector<8x128xf32> -> vector<8x128xf32>
    %19 = vector.broadcast %2 : vector<1x128xf32> to vector<8x128xf32>
    %20 = arith.addf %18, %19 : vector<8x128xf32>
    %cst_10 = arith.constant 0.000000e+00 : f32
    %21 = vector.broadcast %cst_10 : f32 to vector<8x128xf32>
    %22 = arith.cmpf ogt, %20, %21 : vector<8x128xf32>
    %cst_11 = arith.constant 0.00999999977 : f32
    %23 = vector.broadcast %cst_11 : f32 to vector<8x128xf32>
    %24 = arith.mulf %23, %20 : vector<8x128xf32>
    %25 = arith.select %22, %20, %24 : vector<8x128xi1>, vector<8x128xf32>
    %26 = arith.truncf %25 : vector<8x128xf32> to vector<8x128xbf16>
    %c0_12 = arith.constant 0 : index
    %c0_13 = arith.constant 0 : index
    %27 = vector.load %arg4[%c0_12, %c0_13] : memref<128x6xbf16, #tpu.memory_space<vmem>>, vector<128x6xbf16>
    %cst_14 = arith.constant dense<0.000000e+00> : vector<8x6xf32>
    %28 = tpu.matmul %26, %27, %cst_14 {dimension_numbers = #tpu.dot_dimension_numbers<[1], [0], [0], [1], [0, 0, 1, 1], [], []>} : vector<8x128xbf16>, vector<128x6xbf16>, vector<8x6xf32> -> vector<8x6xf32>
    %29 = vector.broadcast %3 : vector<1x6xf32> to vector<8x6xf32>
    %30 = arith.addf %28, %29 : vector<8x6xf32>
    %31 = math.tanh %30 : vector<8x6xf32>
    %32 = vector.broadcast %4 : vector<1x6xf32> to vector<8x6xf32>
    %33 = arith.mulf %31, %32 : vector<8x6xf32>
    %c0_15 = arith.constant 0 : index
    %c0_16 = arith.constant 0 : index
    %34 = vector.load %arg6[%c0_15, %c0_16] : memref<8x6xf32, #tpu.memory_space<vmem>>, vector<8x6xf32>
    tpu.vector_store %arg6[%c0_15, %c0_16], %33 {strides = array<i32>} : memref<8x6xf32, #tpu.memory_space<vmem>>, vector<8x6xf32>,
    return
  }
  func.func @transform_0(%arg0: i32) -> (i32, i32) {
    %c0_i32 = arith.constant 0 : i32
    %c0_i32_0 = arith.constant 0 : i32
    return %arg0, %c0_i32 : i32, i32
  }
  func.func @transform_1(%arg0: i32) -> (i32, i32) {
    %c0_i32 = arith.constant 0 : i32
    %c0_i32_0 = arith.constant 0 : i32
    %c0_i32_1 = arith.constant 0 : i32
    return %c0_i32, %c0_i32_0 : i32, i32
  }
  func.func @transform_2(%arg0: i32) -> (i32, i32) {
    %c0_i32 = arith.constant 0 : i32
    %c0_i32_0 = arith.constant 0 : i32
    %c0_i32_1 = arith.constant 0 : i32
    return %c0_i32, %c0_i32_0 : i32, i32
  }
  func.func @transform_3(%arg0: i32) -> (i32, i32) {
    %c0_i32 = arith.constant 0 : i32
    %c0_i32_0 = arith.constant 0 : i32
    %c0_i32_1 = arith.constant 0 : i32
    return %c0_i32, %c0_i32_0 : i32, i32
  }
  func.func @transform_4(%arg0: i32) -> (i32, i32) {
    %c0_i32 = arith.constant 0 : i32
    %c0_i32_0 = arith.constant 0 : i32
    %c0_i32_1 = arith.constant 0 : i32
    return %c0_i32, %c0_i32_0 : i32, i32
  }
  func.func @transform_5(%arg0: i32) -> (i32, i32) {
    %c0_i32 = arith.constant 0 : i32
    %c0_i32_0 = arith.constant 0 : i32
    return %arg0, %c0_i32 : i32, i32
  }
}

</mosaic_0001>

<llo_original>
// kernel: actor_forward.1
$region0: #{actor_forward.1}
  #allocation0 [shape = 'u32[]', space=smem, size = 0x4, offset = 0x4, fixed_abs, tag = 'smem constant byte address 0x4 - core index']
  #allocation1 [shape = 'u32[144,128]{1,0:T(1,128)}', space=vmem, size = 0x12000, scoped, tag = 'internal scratch']
  %s0 = inlined_call_operand.hbm [shape: f32[8,6], index: 0, kind: input, shape index: {}]
  %s1 = inlined_call_operand.vmem [shape: bf16[6,128], index: 1, kind: input, shape index: {}]
  %s2 = inlined_call_operand.vmem [shape: bf16[128,128], index: 2, kind: input, shape index: {}]
  %s3 = inlined_call_operand.vmem [shape: bf16[128,6], index: 3, kind: input, shape index: {}]
  %s4 = inlined_call_operand.hbm [shape: f32[4,128], index: 4, kind: input, shape index: {}]
  %s5 = inlined_call_operand.hbm [shape: f32[8,6], index: 5, kind: output, shape index: {}]
  %s6 = sld [smem:[#allocation0]]
  $region38: #{actor_forward.1} parent=0
    _
  %s8 = ssub.s32 1, %s6
  %s9 = scalar_select 0, %s8, %s6
  $region1: #{actor_forward.1} parent=0
    #allocation2 [shape = 'u8[4096]{0}', space=vmem, size = 0x1000, scoped, tag = 'input window, operand 0, single buffered']
    #allocation3 [shape = 's32[1]{0}', space=sflag, size = 0x4, scoped, tag = 'scoped memory for actor_forward.1']
    #allocation4 [shape = 's32[1]{0}', space=sflag, size = 0x4, scoped, tag = 'scoped memory for actor_forward.1']
    #allocation5 [shape = 'u8[2048]{0}', space=vmem, size = 0x800, scoped, tag = 'input window, operand 4, single buffered']
    #allocation6 [shape = 's32[1]{0}', space=sflag, size = 0x4, scoped, tag = 'scoped memory for actor_forward.1']
    #allocation7 [shape = 'u8[4096]{0}', space=vmem, size = 0x1000, scoped, tag = 'output window, operand 0, single buffered']
    %10 = vsyncpa [#allocation3], 0
    %11 = vsyncpa [#allocation6], 0
    %12 = vsyncpa [#allocation4], 0
    // Predicated region
    $region2: #{actor_forward.1} parent=1 // pred_check
      _
    $region3: #{actor_forward.1} parent=1 // pred_check_branch
      %14 = sbr.rel (0) target = $region5
    $region4: #{actor_forward.1} parent=1 // pred_region
      %s16 = ssub.s32 128, 128
      %17 = vsyncadd [#allocation3], %s16
      %s19 = sshll.u32 [#allocation2], 4
      %s20 = int_to_ptr.vmem [resolvable:$true] %s19
      %22 = dma.hbm_to_vmem [thread:$0]  %s0, 128, %s20, [#allocation3]
    $region5: #{actor_forward.1} parent=1 // pred_fallthru
      _
    // Predicated region
    $region6: #{actor_forward.1} parent=1 // pred_check
      _
    $region7: #{actor_forward.1} parent=1 // pred_check_branch
      %24 = sbr.rel (0) target = $region9
    $region8: #{actor_forward.1} parent=1 // pred_region
      _
    $region9: #{actor_forward.1} parent=1 // pred_fallthru
      _
    // Predicated region
    $region10: #{actor_forward.1} parent=1 // pred_check
      _
    $region11: #{actor_forward.1} parent=1 // pred_check_branch
      %26 = sbr.rel (0) target = $region13
    $region12: #{actor_forward.1} parent=1 // pred_region
      _
    $region13: #{actor_forward.1} parent=1 // pred_fallthru
      _
    // Predicated region
    $region14: #{actor_forward.1} parent=1 // pred_check
      _
    $region15: #{actor_forward.1} parent=1 // pred_check_branch
      %28 = sbr.rel (0) target = $region17
    $region16: #{actor_forward.1} parent=1 // pred_region
      _
    $region17: #{actor_forward.1} parent=1 // pred_fallthru
      _
    // Predicated region
    $region18: #{actor_forward.1} parent=1 // pred_check
      _
    $region19: #{actor_forward.1} parent=1 // pred_check_branch
      %30 = sbr.rel (0) target = $region21
    $region20: #{actor_forward.1} parent=1 // pred_region
      %s32 = ssub.s32 64, 64
      %33 = vsyncadd [#allocation6], %s32
      %s35 = sshll.u32 [#allocation5], 4
      %s36 = int_to_ptr.vmem [resolvable:$true] %s35
      %38 = dma.hbm_to_vmem [thread:$0]  %s4, 64, %s36, [#allocation6]
    $region21: #{actor_forward.1} parent=1 // pred_fallthru
      _
    // Predicated region
    $region22: #{actor_forward.1} parent=1 // pred_check
      _
    $region23: #{actor_forward.1} parent=1 // pred_check_branch
      %40 = sbr.rel (0) target = $region25
    $region24: #{actor_forward.1} parent=1 // pred_region
      %41 = dma.done [#allocation3], 128
    $region25: #{actor_forward.1} parent=1 // pred_fallthru
      _
    // Predicated region
    $region26: #{actor_forward.1} parent=1 // pred_check
      _
    $region27: #{actor_forward.1} parent=1 // pred_check_branch
      %43 = sbr.rel (0) target = $region29
    $region28: #{actor_forward.1} parent=1 // pred_region
      %44 = dma.done [#allocation6], 64
    $region29: #{actor_forward.1} parent=1 // pred_fallthru
      _
    %v46 = vld [vmem:[#allocation5] sm:$0xf]
    %v47 = vld [vmem:[#allocation2] sm:$0xff]
    %v48 = vpack.c.bf16 %v47, %v47
    %v49 = vld [vmem:[%s1] sm:$0x7]
    %v50 = vlaneseq
    %v51 = vshrl.u32 %v50, 7
    %v52 = vsub.s32 0, %v51
    %v53 = vrot.slane %v46, %v52
    %vm54 = vcmask 48128
    %v56 = vsel %vm54, %v48, 0
    %vm58 = vcmask 1042432
    %v60 = vsel %vm58, %v49, 0
    %62 = vmatprep.subr.bf16.mxu0 0
    %63 = vmatpush1.bf16.msra.mxu0 0
    %64 = vmatprep.subr.bf16.mxu0 0
    %65 = vmatpush1.bf16.msra.mxu0 0
    %66 = vmatprep.subr.bf16.mxu0 0
    %67 = vmatpush1.bf16.msra.mxu0 0
    %68 = vmatprep.subr.bf16.mxu0 0
    %69 = vmatpush1.bf16.msra.mxu0 0
    %70 = vmatprep.subr.bf16.mxu0 0
    %71 = vmatpush1.bf16.msra.mxu0 0
    %72 = vmatprep.subr.bf16.mxu0 0
    %73 = vmatpush1.bf16.msra.mxu0 0
    %74 = vmatprep.subr.bf16.mxu0 0
    %75 = vmatpush1.bf16.msra.mxu0 0
    %76 = vmatprep.subr.bf16.mxu0 0
    %77 = vmatpush1.bf16.msra.mxu0 %v60
    %78 = vmatprep.subr.bf16.mxu0 0
    %79 = vmatpush2.bf16.msra.mxu0 0
    %80 = vmatprep.subr.bf16.mxu0 0
    %81 = vmatpush2.bf16.msra.mxu0 0
    %82 = vmatprep.subr.bf16.mxu0 0
    %83 = vmatpush2.bf16.msra.mxu0 0
    %84 = vmatprep.subr.bf16.mxu0 0
    %85 = vmatpush2.bf16.msra.mxu0 0
    %86 = vmatprep.subr.bf16.mxu0 0
    %87 = vmatpush2.bf16.msra.mxu0 0
    %88 = vmatprep.subr.bf16.mxu0 0
    %89 = vmatpush2.bf16.msra.mxu0 0
    %90 = vmatprep.subr.bf16.mxu0 0
    %91 = vmatpush2.bf16.msra.mxu0 0
    %92 = vmatprep.subr.bf16.mxu0 0
    %93 = vmatpush2.bf16.msra.mxu0 0
    %94 = vmatprep.mubr.bf16.mxu0 0
    %95 = vmatmul.mubr.bf16.gmra.mxu0 %v56
    %v96 = vpop.f32.mrf.mxu0
    %v97 = vadd.f32 %v53, %v96
    %v98 = vpop.f32.mrf.mxu0
    %v99 = vpop.f32.mrf.mxu0
    %v100 = vpop.f32.mrf.mxu0
    %101 = vdwg.mxu0
    %vm102 = vcmp.gt.f32.partialorder %v97, 0.0
    %v103 = vmul.f32 %v97, 0.01
    %v104 = vsel %vm102, %v97, %v103
    %v105 = vpack.c.bf16 %v104, %v104
    %v106 = vld [vmem:[%s2] sm:$0xf]
    %v107 = vld [vmem:[%s2 + $0x4] sm:$0xf]
    %v108 = vld [vmem:[%s2 + $0x8] sm:$0xf]
    %v109 = vld [vmem:[%s2 + $0xc] sm:$0xf]
    %v110 = vld [vmem:[%s2 + $0x10] sm:$0xf]
    %v111 = vld [vmem:[%s2 + $0x14] sm:$0xf]
    %v112 = vld [vmem:[%s2 + $0x18] sm:$0xf]
    %v113 = vld [vmem:[%s2 + $0x1c] sm:$0xf]
    %v114 = vld [vmem:[%s2 + $0x20] sm:$0xf]
    %v115 = vld [vmem:[%s2 + $0x24] sm:$0xf]
    %v116 = vld [vmem:[%s2 + $0x28] sm:$0xf]
    %v117 = vld [vmem:[%s2 + $0x2c] sm:$0xf]
    %v118 = vld [vmem:[%s2 + $0x30] sm:$0xf]
    %v119 = vld [vmem:[%s2 + $0x34] sm:$0xf]
    %v120 = vld [vmem:[%s2 + $0x38] sm:$0xf]
    %v121 = vld [vmem:[%s2 + $0x3c] sm:$0xf]
    %v122 = vlaneseq
    %v123 = vshrl.u32 %v122, 7
    %v124 = vsub.s32 1, %v123
    %v125 = vrot.slane %v46, %v124
    %v142 = vunpack.c.l.b16 %v106
    %v143 = vunpack.c.l.b16 %v107
    %v144 = vunpack.c.l.b16 %v108
    %v145 = vunpack.c.l.b16 %v109
    %v146 = vunpack.c.l.b16 %v110
    %v147 = vunpack.c.l.b16 %v111
    %v148 = vunpack.c.l.b16 %v112
    %v149 = vunpack.c.l.b16 %v113
    %v150 = vunpack.c.l.b16 %v114
    %v151 = vunpack.c.l.b16 %v115
    %v152 = vunpack.c.l.b16 %v116
    %v153 = vunpack.c.l.b16 %v117
    %v154 = vunpack.c.l.b16 %v118
    %v155 = vunpack.c.l.b16 %v119
    %v156 = vunpack.c.l.b16 %v120
    %v157 = vunpack.c.l.b16 %v121
    %v158 = vpack.c.b16 %v143, %v142
    %v159 = vpack.c.b16 %v145, %v144
    %v160 = vpack.c.b16 %v147, %v146
    %v161 = vpack.c.b16 %v149, %v148
    %v162 = vpack.c.b16 %v151, %v150
    %v163 = vpack.c.b16 %v153, %v152
    %v164 = vpack.c.b16 %v155, %v154
    %v165 = vpack.c.b16 %v157, %v156
    %174 = vmatprep.subr.bf16.mxu0 0
    %175 = vmatpush1.bf16.msra.mxu0 %v165
    %176 = vmatprep.subr.bf16.mxu0 0
    %177 = vmatpush1.bf16.msra.mxu0 %v164
    %178 = vmatprep.subr.bf16.mxu0 0
    %179 = vmatpush1.bf16.msra.mxu0 %v163
    %180 = vmatprep.subr.bf16.mxu0 0
    %181 = vmatpush1.bf16.msra.mxu0 %v162
    %182 = vmatprep.subr.bf16.mxu0 0
    %183 = vmatpush1.bf16.msra.mxu0 %v161
    %184 = vmatprep.subr.bf16.mxu0 0
    %185 = vmatpush1.bf16.msra.mxu0 %v160
    %186 = vmatprep.subr.bf16.mxu0 0
    %187 = vmatpush1.bf16.msra.mxu0 %v159
    %188 = vmatprep.subr.bf16.mxu0 0
    %189 = vmatpush1.bf16.msra.mxu0 %v158
    %190 = vmatprep.subr.bf16.mxu0 0
    %191 = vmatpush2.bf16.msra.mxu0 0
    %192 = vmatprep.subr.bf16.mxu0 0
    %193 = vmatpush2.bf16.msra.mxu0 0
    %194 = vmatprep.subr.bf16.mxu0 0
    %195 = vmatpush2.bf16.msra.mxu0 0
    %196 = vmatprep.subr.bf16.mxu0 0
    %197 = vmatpush2.bf16.msra.mxu0 0
    %198 = vmatprep.subr.bf16.mxu0 0
    %199 = vmatpush2.bf16.msra.mxu0 0
    %200 = vmatprep.subr.bf16.mxu0 0
    %201 = vmatpush2.bf16.msra.mxu0 0
    %202 = vmatprep.subr.bf16.mxu0 0
    %203 = vmatpush2.bf16.msra.mxu0 0
    %204 = vmatprep.subr.bf16.mxu0 0
    %205 = vmatpush2.bf16.msra.mxu0 0
    %206 = vmatprep.mubr.bf16.mxu0 0
    %207 = vmatmul.mubr.bf16.gmra.mxu0 %v105
    %v208 = vpop.f32.mrf.mxu0
    %v209 = vadd.f32 %v125, %v208
    %v210 = vpop.f32.mrf.mxu0
    %v211 = vpop.f32.mrf.mxu0
    %v212 = vpop.f32.mrf.mxu0
    %213 = vdwg.mxu0
    %vm214 = vcmp.gt.f32.partialorder %v209, 0.0
    %v215 = vmul.f32 %v209, 0.01
    %v216 = vsel %vm214, %v209, %v215
    %v217 = vpack.c.bf16 %v216, %v216
    %v218 = vld [vmem:[%s3] sm:$0xf]
    %v219 = vld [vmem:[%s3 + $0x4] sm:$0xf]
    %v220 = vld [vmem:[%s3 + $0x8] sm:$0xf]
    %v221 = vld [vmem:[%s3 + $0xc] sm:$0xf]
    %v222 = vld [vmem:[%s3 + $0x10] sm:$0xf]
    %v223 = vld [vmem:[%s3 + $0x14] sm:$0xf]
    %v224 = vld [vmem:[%s3 + $0x18] sm:$0xf]
    %v225 = vld [vmem:[%s3 + $0x1c] sm:$0xf]
    %v226 = vld [vmem:[%s3 + $0x20] sm:$0xf]
    %v227 = vld [vmem:[%s3 + $0x24] sm:$0xf]
    %v228 = vld [vmem:[%s3 + $0x28] sm:$0xf]
    %v229 = vld [vmem:[%s3 + $0x2c] sm:$0xf]
    %v230 = vld [vmem:[%s3 + $0x30] sm:$0xf]
    %v231 = vld [vmem:[%s3 + $0x34] sm:$0xf]
    %v232 = vld [vmem:[%s3 + $0x38] sm:$0xf]
    %v233 = vld [vmem:[%s3 + $0x3c] sm:$0xf]
    %v234 = vlaneseq
    %v235 = vshrl.u32 %v234, 7
    %v236 = vsub.s32 2, %v235
    %v237 = vrot.slane %v46, %v236
    %v254 = vunpack.c.l.b16 %v218
    %v255 = vunpack.c.l.b16 %v219
    %v256 = vunpack.c.l.b16 %v220
    %v257 = vunpack.c.l.b16 %v221
    %v258 = vunpack.c.l.b16 %v222
    %v259 = vunpack.c.l.b16 %v223
    %v260 = vunpack.c.l.b16 %v224
    %v261 = vunpack.c.l.b16 %v225
    %v262 = vunpack.c.l.b16 %v226
    %v263 = vunpack.c.l.b16 %v227
    %v264 = vunpack.c.l.b16 %v228
    %v265 = vunpack.c.l.b16 %v229
    %v266 = vunpack.c.l.b16 %v230
    %v267 = vunpack.c.l.b16 %v231
    %v268 = vunpack.c.l.b16 %v232
    %v269 = vunpack.c.l.b16 %v233
    %v270 = vpack.c.b16 %v255, %v254
    %v271 = vpack.c.b16 %v257, %v256
    %v272 = vpack.c.b16 %v259, %v258
    %v273 = vpack.c.b16 %v261, %v260
    %v274 = vpack.c.b16 %v263, %v262
    %v275 = vpack.c.b16 %v265, %v264
    %v276 = vpack.c.b16 %v267, %v266
    %v277 = vpack.c.b16 %v269, %v268
    %286 = vmatprep.subr.bf16.mxu0 0
    %287 = vmatpush1.bf16.msra.mxu0 %v277
    %288 = vmatprep.subr.bf16.mxu0 0
    %289 = vmatpush1.bf16.msra.mxu0 %v276
    %290 = vmatprep.subr.bf16.mxu0 0
    %291 = vmatpush1.bf16.msra.mxu0 %v275
    %292 = vmatprep.subr.bf16.mxu0 0
    %293 = vmatpush1.bf16.msra.mxu0 %v274
    %294 = vmatprep.subr.bf16.mxu0 0
    %295 = vmatpush1.bf16.msra.mxu0 %v273
    %296 = vmatprep.subr.bf16.mxu0 0
    %297 = vmatpush1.bf16.msra.mxu0 %v272
    %298 = vmatprep.subr.bf16.mxu0 0
    %299 = vmatpush1.bf16.msra.mxu0 %v271
    %300 = vmatprep.subr.bf16.mxu0 0
    %301 = vmatpush1.bf16.msra.mxu0 %v270
    %302 = vmatprep.subr.bf16.mxu0 0
    %303 = vmatpush2.bf16.msra.mxu0 0
    %304 = vmatprep.subr.bf16.mxu0 0
    %305 = vmatpush2.bf16.msra.mxu0 0
    %306 = vmatprep.subr.bf16.mxu0 0
    %307 = vmatpush2.bf16.msra.mxu0 0
    %308 = vmatprep.subr.bf16.mxu0 0
    %309 = vmatpush2.bf16.msra.mxu0 0
    %310 = vmatprep.subr.bf16.mxu0 0
    %311 = vmatpush2.bf16.msra.mxu0 0
    %312 = vmatprep.subr.bf16.mxu0 0
    %313 = vmatpush2.bf16.msra.mxu0 0
    %314 = vmatprep.subr.bf16.mxu0 0
    %315 = vmatpush2.bf16.msra.mxu0 0
    %316 = vmatprep.subr.bf16.mxu0 0
    %317 = vmatpush2.bf16.msra.mxu0 0
    %318 = vmatprep.mubr.bf16.mxu0 0
    %319 = vmatmul.mubr.bf16.gmra.mxu0 %v217
    %v320 = vpop.f32.mrf.mxu0
    %v321 = vadd.f32 %v237, %v320
    %v322 = vpop.f32.mrf.mxu0
    %v323 = vpop.f32.mrf.mxu0
    %v324 = vpop.f32.mrf.mxu0
    %325 = vdwg.mxu0
    %v326 = vtanh.pop %v321
    %v327 = vlaneseq
    %v328 = vshrl.u32 %v327, 7
    %v329 = vsub.s32 3, %v328
    %v330 = vrot.slane %v46, %v329
    %v331 = vmul.f32 %v326, %v330
    %332 = vst.msk [vmem:[#allocation7] sm:$0xff] %vm54, %v331
    // Predicated region
    $region30: #{actor_forward.1} parent=1 // pred_check
      _
    $region31: #{actor_forward.1} parent=1 // pred_check_branch
      %334 = sbr.rel (0) target = $region33
    $region32: #{actor_forward.1} parent=1 // pred_region
      %s336 = ssub.s32 128, 128
      %337 = vsyncadd [#allocation4], %s336
      %s339 = sshll.u32 [#allocation7], 4
      %s340 = int_to_ptr.vmem [resolvable:$true] %s339
      %342 = dma.vmem_to_hbm [thread:$0]  %s340, 128, %s5, [#allocation4]
    $region33: #{actor_forward.1} parent=1 // pred_fallthru
      _
    // Predicated region
    $region34: #{actor_forward.1} parent=1 // pred_check
      _
    $region35: #{actor_forward.1} parent=1 // pred_check_branch
      %344 = sbr.rel (0) target = $region37
    $region36: #{actor_forward.1} parent=1 // pred_region
      %345 = dma.done [#allocation4], 128
    $region37: #{actor_forward.1} parent=1 // pred_fallthru
      _
    %346 = vsyncpa [#allocation3], 1
    %347 = vsyncpa [#allocation6], 1
    %348 = vsyncpa [#allocation4], 1

</llo_original>
